<compile_context>
chip_gen: v6e
topology: v6e:2x2x1
jax: 0.10.0
libtpu: 0.0.40
codegen_flags: <defaults>
</compile_context>

<pallas_src>
import functools

import jax
import jax.numpy as jnp
from jax import lax
from jax.experimental import pallas as pl
from jax.experimental.pallas import tpu as pltpu

_LANES = 128
# (1024, 128) f32 block = 512 KiB; 2 inputs x 2 pipeline buffers + 5 VMEM
# accumulators ~ 4.5 MiB total, comfortably inside the default scoped-VMEM
# limit on v5e / v6e / v7x.
_MAX_BLOCK_ROWS = 1024


def _round_up(x, m):
    return (x + m - 1) // m * m


def _cross_corr_kernel(x_ref, y_ref, o_ref,
                       sx_ref, sy_ref, sxy_ref, sxx_ref, syy_ref,
                       *, n_valid, total_rows, block_rows, mask_rows):
    """Single-pass raw-moment negative Pearson correlation.

    grid = (num_tiles,), sequential ("arbitrary") so the VMEM accumulators
    carry across tiles.  Finalize reduces the vector accumulators to scalars
    once and writes the loss to the SMEM output.
    """
    t = pl.program_id(0)
    nt = pl.num_programs(0)

    @pl.when(t == 0)
    def _init():
        sx_ref[...] = jnp.zeros_like(sx_ref)
        sy_ref[...] = jnp.zeros_like(sy_ref)
        sxy_ref[...] = jnp.zeros_like(sxy_ref)
        sxx_ref[...] = jnp.zeros_like(sxx_ref)
        syy_ref[...] = jnp.zeros_like(syy_ref)

    x = x_ref[...].astype(jnp.float32)
    y = y_ref[...].astype(jnp.float32)

    if mask_rows:
        # Only compiled in when rows % block_rows != 0: zero out the
        # out-of-bounds rows of the (partial) last block.  Zero lane-padding
        # inside valid rows needs no mask (neutral for raw moments).
        row_ids = (lax.broadcasted_iota(jnp.int32, (block_rows, _LANES), 0)
                   + t * block_rows)
        valid = row_ids < total_rows
        x = jnp.where(valid, x, 0.0)
        y = jnp.where(valid, y, 0.0)

    # Pure VPU elementwise accumulation — no per-tile cross-lane reduce.
    sx_ref[...] += x
    sy_ref[...] += y
    sxy_ref[...] += x * y
    sxx_ref[...] += x * x
    syy_ref[...] += y * y

    @pl.when(t == nt - 1)
    def _finalize():
        n = jnp.float32(n_valid)
        s_x = jnp.sum(sx_ref[...])
        s_y = jnp.sum(sy_ref[...])
        s_xy = jnp.sum(sxy_ref[...])
        s_xx = jnp.sum(sxx_ref[...])
        s_yy = jnp.sum(syy_ref[...])
        num = s_xy - s_x * s_y / n
        var_x = s_xx - s_x * s_x / n
        var_y = s_yy - s_y * s_y / n
        o_ref[0] = -(num / (jnp.sqrt(var_x) * jnp.sqrt(var_y)))


def cross_corr_loss(output, target):
    """Negative Pearson correlation over all elements (matches CrossCorrLoss)."""
    assert output.shape == target.shape, "output/target must have same shape"
    n_valid = int(output.size)

    # Stream the original dtype through HBM (no up-cast copy in the wrapper).
    x_flat = jnp.ravel(output)
    y_flat = jnp.ravel(target)

    # View as a (rows, 128) slab.  Zero lane-padding (only when size is not a
    # multiple of 128) is neutral for the raw moments, so no mask is needed
    # for it.
    lane_pad = (-n_valid) % _LANES
    if lane_pad:
        # TODO(synk): for very large non-128-divisible inputs, fold the small
        # tail into the finalize scalars instead of paying this pad copy.
        x_flat = jnp.pad(x_flat, (0, lane_pad))
        y_flat = jnp.pad(y_flat, (0, lane_pad))
    rows = (n_valid + lane_pad) // _LANES
    x2d = x_flat.reshape(rows, _LANES)
    y2d = y_flat.reshape(rows, _LANES)

    block_rows = min(_MAX_BLOCK_ROWS, _round_up(rows, 8))
    num_tiles = -(-rows // block_rows)
    mask_rows = (rows % block_rows) != 0

    kernel = functools.partial(
        _cross_corr_kernel,
        n_valid=n_valid,
        total_rows=rows,
        block_rows=block_rows,
        mask_rows=mask_rows,
    )

    tile_spec = pl.BlockSpec((block_rows, _LANES), lambda t: (t, 0))

    out = pl.pallas_call(
        kernel,
        out_shape=jax.ShapeDtypeStruct((1,), jnp.float32),
        grid_spec=pltpu.PrefetchScalarGridSpec(
            num_scalar_prefetch=0,
            grid=(num_tiles,),
            in_specs=[tile_spec, tile_spec],
            out_specs=pl.BlockSpec(memory_space=pltpu.MemorySpace.SMEM),
            scratch_shapes=[
                pltpu.VMEM((block_rows, _LANES), jnp.float32)
                for _ in range(5)
            ],
        ),
        compiler_params=pltpu.CompilerParams(
            dimension_semantics=("arbitrary",)),
    )(x2d, y2d)
    return out[0]


def _reference(output, target):
    x = output.astype(jnp.float32)
    y = target.astype(jnp.float32)
    vx = x - jnp.mean(x)
    vy = y - jnp.mean(y)
    return -(jnp.sum(vx * vy) /
             (jnp.sqrt(jnp.sum(vx ** 2)) * jnp.sqrt(jnp.sum(vy ** 2))))


if __name__ == "__main__":
    key = jax.random.PRNGKey(0)
    k1, k2 = jax.random.split(key)
    # NCHW-shaped inputs (module is a loss over full tensors).
    output = jax.random.normal(k1, (2, 4, 16, 16), dtype=jnp.float32)
    # make target partially correlated with output
    target = 0.5 * output + 0.5 * jax.random.normal(k2, (2, 4, 16, 16),
                                                    dtype=jnp.float32)

    loss = cross_corr_loss(output, target)
    jax.block_until_ready(loss)

    ref = _reference(output, target)
    assert jnp.allclose(loss, ref, atol=1e-5, rtol=1e-4), (loss, ref)
    print("KERNEL_OK")
</pallas_src>

<mosaic_0001>
module attributes {stable_mosaic.version = 11 : i64} {
  func.func @_cross_corr_kernel(%arg0: i32, %arg1: memref<16x128xf32, #tpu.memory_space<vmem>>, %arg2: memref<16x128xf32, #tpu.memory_space<vmem>>, %arg3: memref<1xf32, #tpu.memory_space<smem>>, %arg4: memref<16x128xf32, #tpu.memory_space<vmem>>, %arg5: memref<16x128xf32, #tpu.memory_space<vmem>>, %arg6: memref<16x128xf32, #tpu.memory_space<vmem>>, %arg7: memref<16x128xf32, #tpu.memory_space<vmem>>, %arg8: memref<16x128xf32, #tpu.memory_space<vmem>>) attributes {dimension_semantics = [#tpu.dimension_semantics<arbitrary>], iteration_bounds = array<i64: 1>, scalar_prefetch = 0 : i64, scratch_operands = 5 : i64, tpu.core_type = #tpu.core_type<tc>, window_params = [{transform_indices = @transform_0, window_bounds = array<i64: 16, 128>}, {transform_indices = @transform_1, window_bounds = array<i64: 16, 128>}, {transform_indices = @transform_2, window_bounds = array<i64: 1>}]} {
    %c0_i32 = arith.constant 0 : i32
    %0 = arith.cmpi eq, %arg0, %c0_i32 : i32
    %1 = arith.extui %0 : i1 to i32
    %c0_i32_0 = arith.constant 0 : i32
    %2 = arith.cmpi ne, %1, %c0_i32_0 : i32
    scf.if %2 {
      %cst = arith.constant 0.000000e+00 : f32
      %26 = vector.broadcast %cst : f32 to vector<16x128xf32>
      %c0_26 = arith.constant 0 : index
      %c0_27 = arith.constant 0 : index
      %27 = vector.load %arg4[%c0_26, %c0_27] : memref<16x128xf32, #tpu.memory_space<vmem>>, vector<16x128xf32>
      tpu.vector_store %arg4[%c0_26, %c0_27], %26 {strides = array<i32>} : memref<16x128xf32, #tpu.memory_space<vmem>>, vector<16x128xf32>,
      %cst_28 = arith.constant 0.000000e+00 : f32
      %28 = vector.broadcast %cst_28 : f32 to vector<16x128xf32>
      %c0_29 = arith.constant 0 : index
      %c0_30 = arith.constant 0 : index
      %29 = vector.load %arg5[%c0_29, %c0_30] : memref<16x128xf32, #tpu.memory_space<vmem>>, vector<16x128xf32>
      tpu.vector_store %arg5[%c0_29, %c0_30], %28 {strides = array<i32>} : memref<16x128xf32, #tpu.memory_space<vmem>>, vector<16x128xf32>,
      %cst_31 = arith.constant 0.000000e+00 : f32
      %30 = vector.broadcast %cst_31 : f32 to vector<16x128xf32>
      %c0_32 = arith.constant 0 : index
      %c0_33 = arith.constant 0 : index
      %31 = vector.load %arg6[%c0_32, %c0_33] : memref<16x128xf32, #tpu.memory_space<vmem>>, vector<16x128xf32>
      tpu.vector_store %arg6[%c0_32, %c0_33], %30 {strides = array<i32>} : memref<16x128xf32, #tpu.memory_space<vmem>>, vector<16x128xf32>,
      %cst_34 = arith.constant 0.000000e+00 : f32
      %32 = vector.broadcast %cst_34 : f32 to vector<16x128xf32>
      %c0_35 = arith.constant 0 : index
      %c0_36 = arith.constant 0 : index
      %33 = vector.load %arg7[%c0_35, %c0_36] : memref<16x128xf32, #tpu.memory_space<vmem>>, vector<16x128xf32>
      tpu.vector_store %arg7[%c0_35, %c0_36], %32 {strides = array<i32>} : memref<16x128xf32, #tpu.memory_space<vmem>>, vector<16x128xf32>,
      %cst_37 = arith.constant 0.000000e+00 : f32
      %34 = vector.broadcast %cst_37 : f32 to vector<16x128xf32>
      %c0_38 = arith.constant 0 : index
      %c0_39 = arith.constant 0 : index
      %35 = vector.load %arg8[%c0_38, %c0_39] : memref<16x128xf32, #tpu.memory_space<vmem>>, vector<16x128xf32>
      tpu.vector_store %arg8[%c0_38, %c0_39], %34 {strides = array<i32>} : memref<16x128xf32, #tpu.memory_space<vmem>>, vector<16x128xf32>,
    } else {
    }
    %c0 = arith.constant 0 : index
    %c0_1 = arith.constant 0 : index
    %3 = vector.load %arg1[%c0, %c0_1] : memref<16x128xf32, #tpu.memory_space<vmem>>, vector<16x128xf32>
    %c0_2 = arith.constant 0 : index
    %c0_3 = arith.constant 0 : index
    %4 = vector.load %arg2[%c0_2, %c0_3] : memref<16x128xf32, #tpu.memory_space<vmem>>, vector<16x128xf32>
    %c0_4 = arith.constant 0 : index
    %c0_5 = arith.constant 0 : index
    %5 = vector.load %arg4[%c0_4, %c0_5] : memref<16x128xf32, #tpu.memory_space<vmem>>, vector<16x128xf32>
    %6 = arith.addf %5, %3 : vector<16x128xf32>
    %c0_6 = arith.constant 0 : index
    %c0_7 = arith.constant 0 : index
    %7 = vector.load %arg4[%c0_6, %c0_7] : memref<16x128xf32, #tpu.memory_space<vmem>>, vector<16x128xf32>
    tpu.vector_store %arg4[%c0_6, %c0_7], %6 {strides = array<i32>} : memref<16x128xf32, #tpu.memory_space<vmem>>, vector<16x128xf32>,
    %c0_8 = arith.constant 0 : index
    %c0_9 = arith.constant 0 : index
    %8 = vector.load %arg5[%c0_8, %c0_9] : memref<16x128xf32, #tpu.memory_space<vmem>>, vector<16x128xf32>
    %9 = arith.addf %8, %4 : vector<16x128xf32>
    %c0_10 = arith.constant 0 : index
    %c0_11 = arith.constant 0 : index
    %10 = vector.load %arg5[%c0_10, %c0_11] : memref<16x128xf32, #tpu.memory_space<vmem>>, vector<16x128xf32>
    tpu.vector_store %arg5[%c0_10, %c0_11], %9 {strides = array<i32>} : memref<16x128xf32, #tpu.memory_space<vmem>>, vector<16x128xf32>,
    %c0_12 = arith.constant 0 : index
    %c0_13 = arith.constant 0 : index
    %11 = vector.load %arg6[%c0_12, %c0_13] : memref<16x128xf32, #tpu.memory_space<vmem>>, vector<16x128xf32>
    %12 = arith.mulf %3, %4 : vector<16x128xf32>
    %13 = arith.addf %11, %12 : vector<16x128xf32>
    %c0_14 = arith.constant 0 : index
    %c0_15 = arith.constant 0 : index
    %14 = vector.load %arg6[%c0_14, %c0_15] : memref<16x128xf32, #tpu.memory_space<vmem>>, vector<16x128xf32>
    tpu.vector_store %arg6[%c0_14, %c0_15], %13 {strides = array<i32>} : memref<16x128xf32, #tpu.memory_space<vmem>>, vector<16x128xf32>,
    %c0_16 = arith.constant 0 : index
    %c0_17 = arith.constant 0 : index
    %15 = vector.load %arg7[%c0_16, %c0_17] : memref<16x128xf32, #tpu.memory_space<vmem>>, vector<16x128xf32>
    %16 = arith.mulf %3, %3 : vector<16x128xf32>
    %17 = arith.addf %15, %16 : vector<16x128xf32>
    %c0_18 = arith.constant 0 : index
    %c0_19 = arith.constant 0 : index
    %18 = vector.load %arg7[%c0_18, %c0_19] : memref<16x128xf32, #tpu.memory_space<vmem>>, vector<16x128xf32>
    tpu.vector_store %arg7[%c0_18, %c0_19], %17 {strides = array<i32>} : memref<16x128xf32, #tpu.memory_space<vmem>>, vector<16x128xf32>,
    %c0_20 = arith.constant 0 : index
    %c0_21 = arith.constant 0 : index
    %19 = vector.load %arg8[%c0_20, %c0_21] : memref<16x128xf32, #tpu.memory_space<vmem>>, vector<16x128xf32>
    %20 = arith.mulf %4, %4 : vector<16x128xf32>
    %21 = arith.addf %19, %20 : vector<16x128xf32>
    %c0_22 = arith.constant 0 : index
    %c0_23 = arith.constant 0 : index
    %22 = vector.load %arg8[%c0_22, %c0_23] : memref<16x128xf32, #tpu.memory_space<vmem>>, vector<16x128xf32>
    tpu.vector_store %arg8[%c0_22, %c0_23], %21 {strides = array<i32>} : memref<16x128xf32, #tpu.memory_space<vmem>>, vector<16x128xf32>,
    %c0_i32_24 = arith.constant 0 : i32
    %23 = arith.cmpi eq, %arg0, %c0_i32_24 : i32
    %24 = arith.extui %23 : i1 to i32
    %c0_i32_25 = arith.constant 0 : i32
    %25 = arith.cmpi ne, %24, %c0_i32_25 : i32
    scf.if %25 {
      %c0_26 = arith.constant 0 : index
      %c0_27 = arith.constant 0 : index
      %26 = vector.load %arg4[%c0_26, %c0_27] : memref<16x128xf32, #tpu.memory_space<vmem>>, vector<16x128xf32>
      %27 = vector.shape_cast %26 : vector<16x128xf32> to vector<1x16x128xf32>
      %cst = arith.constant dense<0.000000e+00> : vector<1xf32>
      %28 = vector.multi_reduction <add>, %27, %cst [1, 2] : vector<1x16x128xf32> to vector<1xf32>
      %29 = vector.shape_cast %28 : vector<1xf32> to vector<1x1x1xf32>
      %30 = vector.extract %29[0, 0, 0] : f32 from vector<1x1x1xf32>
      %c0_28 = arith.constant 0 : index
      %c0_29 = arith.constant 0 : index
      %31 = vector.load %arg5[%c0_28, %c0_29] : memref<16x128xf32, #tpu.memory_space<vmem>>, vector<16x128xf32>
      %32 = vector.shape_cast %31 : vector<16x128xf32> to vector<1x16x128xf32>
      %cst_30 = arith.constant dense<0.000000e+00> : vector<1xf32>
      %33 = vector.multi_reduction <add>, %32, %cst_30 [1, 2] : vector<1x16x128xf32> to vector<1xf32>
      %34 = vector.shape_cast %33 : vector<1xf32> to vector<1x1x1xf32>
      %35 = vector.extract %34[0, 0, 0] : f32 from vector<1x1x1xf32>
      %c0_31 = arith.constant 0 : index
      %c0_32 = arith.constant 0 : index
      %36 = vector.load %arg6[%c0_31, %c0_32] : memref<16x128xf32, #tpu.memory_space<vmem>>, vector<16x128xf32>
      %37 = vector.shape_cast %36 : vector<16x128xf32> to vector<1x16x128xf32>
      %cst_33 = arith.constant dense<0.000000e+00> : vector<1xf32>
      %38 = vector.multi_reduction <add>, %37, %cst_33 [1, 2] : vector<1x16x128xf32> to vector<1xf32>
      %39 = vector.shape_cast %38 : vector<1xf32> to vector<1x1x1xf32>
      %40 = vector.extract %39[0, 0, 0] : f32 from vector<1x1x1xf32>
      %c0_34 = arith.constant 0 : index
      %c0_35 = arith.constant 0 : index
      %41 = vector.load %arg7[%c0_34, %c0_35] : memref<16x128xf32, #tpu.memory_space<vmem>>, vector<16x128xf32>
      %42 = vector.shape_cast %41 : vector<16x128xf32> to vector<1x16x128xf32>
      %cst_36 = arith.constant dense<0.000000e+00> : vector<1xf32>
      %43 = vector.multi_reduction <add>, %42, %cst_36 [1, 2] : vector<1x16x128xf32> to vector<1xf32>
      %44 = vector.shape_cast %43 : vector<1xf32> to vector<1x1x1xf32>
      %45 = vector.extract %44[0, 0, 0] : f32 from vector<1x1x1xf32>
      %c0_37 = arith.constant 0 : index
      %c0_38 = arith.constant 0 : index
      %46 = vector.load %arg8[%c0_37, %c0_38] : memref<16x128xf32, #tpu.memory_space<vmem>>, vector<16x128xf32>
      %47 = vector.shape_cast %46 : vector<16x128xf32> to vector<1x16x128xf32>
      %cst_39 = arith.constant dense<0.000000e+00> : vector<1xf32>
      %48 = vector.multi_reduction <add>, %47, %cst_39 [1, 2] : vector<1x16x128xf32> to vector<1xf32>
      %49 = vector.shape_cast %48 : vector<1xf32> to vector<1x1x1xf32>
      %50 = vector.extract %49[0, 0, 0] : f32 from vector<1x1x1xf32>
      %51 = arith.mulf %30, %35 : f32
      %cst_40 = arith.constant 2.048000e+03 : f32
      %52 = arith.divf %51, %cst_40 : f32
      %53 = arith.subf %40, %52 : f32
      %54 = arith.mulf %30, %30 : f32
      %cst_41 = arith.constant 2.048000e+03 : f32
      %55 = arith.divf %54, %cst_41 : f32
      %56 = arith.subf %45, %55 : f32
      %57 = arith.mulf %35, %35 : f32
      %cst_42 = arith.constant 2.048000e+03 : f32
      %58 = arith.divf %57, %cst_42 : f32
      %59 = arith.subf %50, %58 : f32
      %60 = math.sqrt %56 : f32
      %61 = math.sqrt %59 : f32
      %62 = arith.mulf %60, %61 : f32
      %63 = arith.divf %53, %62 : f32
      %cst_43 = arith.constant 0.000000e+00 : f32
      %64 = arith.subf %cst_43, %63 : f32
      %c0_44 = arith.constant 0 : index
      %65 = memref.load %arg3[%c0_44] : memref<1xf32, #tpu.memory_space<smem>>
      memref.store %64, %arg3[%c0_44] : memref<1xf32, #tpu.memory_space<smem>>
    } else {
    }
    return
  }
  func.func @transform_0(%arg0: i32) -> (i32, i32) {
    %c0_i32 = arith.constant 0 : i32
    %c0_i32_0 = arith.constant 0 : i32
    return %arg0, %c0_i32 : i32, i32
  }
  func.func @transform_1(%arg0: i32) -> (i32, i32) {
    %c0_i32 = arith.constant 0 : i32
    %c0_i32_0 = arith.constant 0 : i32
    return %arg0, %c0_i32 : i32, i32
  }
  func.func @transform_2(%arg0: i32) -> i32 {
    %c0_i32 = arith.constant 0 : i32
    %c0_i32_0 = arith.constant 0 : i32
    return %c0_i32 : i32
  }
}

</mosaic_0001>

<llo_original>
// kernel: tpu_custom_call.1
$region0: #{tpu_custom_call.1}
  #allocation0 [shape = 'u32[]', space=smem, size = 0x4, offset = 0x4, fixed_abs, tag = 'smem constant byte address 0x4 - core index']
  #allocation1 [shape = 'u32[144,128]{1,0:T(1,128)}', space=vmem, size = 0x12000, scoped, tag = 'internal scratch']
  #allocation2 [shape = 'f32[16,128]{1,0:T(8,128)}', space=vmem, size = 0x2000, scoped, tag = 'scratch operand']
  #allocation3 [shape = 'f32[16,128]{1,0:T(8,128)}', space=vmem, size = 0x2000, scoped, tag = 'scratch operand']
  #allocation4 [shape = 'f32[16,128]{1,0:T(8,128)}', space=vmem, size = 0x2000, scoped, tag = 'scratch operand']
  #allocation5 [shape = 'f32[16,128]{1,0:T(8,128)}', space=vmem, size = 0x2000, scoped, tag = 'scratch operand']
  #allocation6 [shape = 'f32[16,128]{1,0:T(8,128)}', space=vmem, size = 0x2000, scoped, tag = 'scratch operand']
  %s0 = inlined_call_operand.hbm [shape: f32[16,128], index: 0, kind: input, shape index: {}]
  %s1 = inlined_call_operand.hbm [shape: f32[16,128], index: 1, kind: input, shape index: {}]
  %s2 = inlined_call_operand.hbm [shape: f32[1], index: 2, kind: output, shape index: {}]
  %s3 = sld [smem:[#allocation0]]
  $region34: #{tpu_custom_call.1} parent=0
    _
  %s5 = ssub.s32 1, %s3
  %s6 = scalar_select 0, %s5, %s3
  $region1: #{tpu_custom_call.1} parent=0
    #allocation7 [shape = 'u8[8192]{0}', space=vmem, size = 0x2000, scoped, tag = 'input window, operand 0, single buffered']
    #allocation8 [shape = 's32[1]{0}', space=sflag, size = 0x4, scoped, tag = 'scoped memory for tpu_custom_call.1']
    #allocation9 [shape = 's32[1]{0}', space=sflag, size = 0x4, scoped, tag = 'scoped memory for tpu_custom_call.1']
    #allocation10 [shape = 'u8[8192]{0}', space=vmem, size = 0x2000, scoped, tag = 'input window, operand 1, single buffered']
    #allocation11 [shape = 's32[1]{0}', space=sflag, size = 0x4, scoped, tag = 'scoped memory for tpu_custom_call.1']
    #allocation12 [shape = 'u8[512]{0}', space=smem, size = 0x200, scoped, tag = 'output window, operand 0, single buffered']
    %7 = vsyncpa [#allocation8], 0
    %8 = vsyncpa [#allocation11], 0
    %9 = vsyncpa [#allocation9], 0
    // Predicated region
    $region2: #{tpu_custom_call.1} parent=1 // pred_check
      _
    $region3: #{tpu_custom_call.1} parent=1 // pred_check_branch
      %11 = sbr.rel (0) target = $region5
    $region4: #{tpu_custom_call.1} parent=1 // pred_region
      %s13 = ssub.s32 256, 256
      %14 = vsyncadd [#allocation8], %s13
      %s15 = sshll.u32 [#allocation7], 4
      %s16 = int_to_ptr.vmem [resolvable:$true] %s15
      %21 = dma.hbm_to_vmem [thread:$0]  %s0, 256, %s16, [#allocation8], 128, 128, 8
    $region5: #{tpu_custom_call.1} parent=1 // pred_fallthru
      _
    // Predicated region
    $region6: #{tpu_custom_call.1} parent=1 // pred_check
      _
    $region7: #{tpu_custom_call.1} parent=1 // pred_check_branch
      %23 = sbr.rel (0) target = $region9
    $region8: #{tpu_custom_call.1} parent=1 // pred_region
      %s25 = ssub.s32 256, 256
      %26 = vsyncadd [#allocation11], %s25
      %s27 = sshll.u32 [#allocation10], 4
      %s28 = int_to_ptr.vmem [resolvable:$true] %s27
      %33 = dma.hbm_to_vmem [thread:$0]  %s1, 256, %s28, [#allocation11], 128, 128, 8
    $region9: #{tpu_custom_call.1} parent=1 // pred_fallthru
      _
    // Predicated region
    $region10: #{tpu_custom_call.1} parent=1 // pred_check
      _
    $region11: #{tpu_custom_call.1} parent=1 // pred_check_branch
      %35 = sbr.rel (0) target = $region13
    $region12: #{tpu_custom_call.1} parent=1 // pred_region
      %36 = dma.done [#allocation8], 256
    $region13: #{tpu_custom_call.1} parent=1 // pred_fallthru
      _
    // Predicated region
    $region14: #{tpu_custom_call.1} parent=1 // pred_check
      _
    $region15: #{tpu_custom_call.1} parent=1 // pred_check_branch
      %38 = sbr.rel (0) target = $region17
    $region16: #{tpu_custom_call.1} parent=1 // pred_region
      %39 = dma.done [#allocation11], 256
    $region17: #{tpu_custom_call.1} parent=1 // pred_fallthru
      _
    %p40 = scmp.eq.s32.totalorder 0, 0
    // Predicated region
    $region18: #{tpu_custom_call.1} parent=1 // pred_check
      %p41 = pneg %p40
    $region19: #{tpu_custom_call.1} parent=1 // pred_check_branch
      %43 = sbr.rel (%p41) target = $region21
    $region20: #{tpu_custom_call.1} parent=1 // pred_region
      %44 = vst [vmem:[#allocation2] sm:$0xff] 0.0
      %45 = vst [vmem:[#allocation2 + $0x8] sm:$0xff] 0.0
      %46 = vst [vmem:[#allocation3] sm:$0xff] 0.0
      %47 = vst [vmem:[#allocation3 + $0x8] sm:$0xff] 0.0
      %48 = vst [vmem:[#allocation4] sm:$0xff] 0.0
      %49 = vst [vmem:[#allocation4 + $0x8] sm:$0xff] 0.0
      %50 = vst [vmem:[#allocation5] sm:$0xff] 0.0
      %51 = vst [vmem:[#allocation5 + $0x8] sm:$0xff] 0.0
      %52 = vst [vmem:[#allocation6] sm:$0xff] 0.0
      %53 = vst [vmem:[#allocation6 + $0x8] sm:$0xff] 0.0
    $region21: #{tpu_custom_call.1} parent=1 // pred_fallthru
      _
    %v54 = vld [vmem:[#allocation7] sm:$0xff]
    %v55 = vld [vmem:[#allocation7 + $0x8] sm:$0xff]
    %v56 = vld [vmem:[#allocation10] sm:$0xff]
    %v57 = vld [vmem:[#allocation10 + $0x8] sm:$0xff]
    %v58 = vld [vmem:[#allocation2] sm:$0xff]
    %v59 = vld [vmem:[#allocation2 + $0x8] sm:$0xff]
    %v60 = vadd.f32 %v58, %v54
    %v61 = vadd.f32 %v59, %v55
    %62 = vst [vmem:[#allocation2] sm:$0xff] %v60
    %63 = vst [vmem:[#allocation2 + $0x8] sm:$0xff] %v61
    %v64 = vld [vmem:[#allocation3] sm:$0xff]
    %v65 = vld [vmem:[#allocation3 + $0x8] sm:$0xff]
    %v66 = vadd.f32 %v64, %v56
    %v67 = vadd.f32 %v65, %v57
    %68 = vst [vmem:[#allocation3] sm:$0xff] %v66
    %69 = vst [vmem:[#allocation3 + $0x8] sm:$0xff] %v67
    %v70 = vld [vmem:[#allocation4] sm:$0xff]
    %v71 = vld [vmem:[#allocation4 + $0x8] sm:$0xff]
    %v72 = vmul.f32 %v54, %v56
    %v73 = vmul.f32 %v55, %v57
    %v74 = vadd.f32 %v70, %v72
    %v75 = vadd.f32 %v71, %v73
    %76 = vst [vmem:[#allocation4] sm:$0xff] %v74
    %77 = vst [vmem:[#allocation4 + $0x8] sm:$0xff] %v75
    %v78 = vld [vmem:[#allocation5] sm:$0xff]
    %v79 = vld [vmem:[#allocation5 + $0x8] sm:$0xff]
    %v80 = vmul.f32 %v54, %v54
    %v81 = vmul.f32 %v55, %v55
    %v82 = vadd.f32 %v78, %v80
    %v83 = vadd.f32 %v79, %v81
    %84 = vst [vmem:[#allocation5] sm:$0xff] %v82
    %85 = vst [vmem:[#allocation5 + $0x8] sm:$0xff] %v83
    %v86 = vld [vmem:[#allocation6] sm:$0xff]
    %v87 = vld [vmem:[#allocation6 + $0x8] sm:$0xff]
    %v88 = vmul.f32 %v56, %v56
    %v89 = vmul.f32 %v57, %v57
    %v90 = vadd.f32 %v86, %v88
    %v91 = vadd.f32 %v87, %v89
    %92 = vst [vmem:[#allocation6] sm:$0xff] %v90
    %93 = vst [vmem:[#allocation6 + $0x8] sm:$0xff] %v91
    // Predicated region
    $region22: #{tpu_custom_call.1} parent=1 // pred_check
      %p94 = pneg %p40
    $region23: #{tpu_custom_call.1} parent=1 // pred_check_branch
      %96 = sbr.rel (%p94) target = $region25
    $region24: #{tpu_custom_call.1} parent=1 // pred_region
      %v97 = vld [vmem:[#allocation2] sm:$0xff]
      %v98 = vld [vmem:[#allocation2 + $0x8] sm:$0xff]
      %v99 = vadd.f32 %v97, %v98
      %100 = vadd.xlane.f32.xlu0 %v99
      %v101 = vpop.xlane.xlu0 %100
      %v102 = vrot.slane %v101, 4
      %v103 = vadd.f32 %v101, %v102
      %v104 = vrot.slane %v103, 2
      %v105 = vadd.f32 %v103, %v104
      %v106 = vrot.slane %v105, 1
      %v107 = vadd.f32 %v105, %v106
      %s108 = vtos %v107
      %v109 = vld [vmem:[#allocation3] sm:$0xff]
      %v110 = vld [vmem:[#allocation3 + $0x8] sm:$0xff]
      %v111 = vadd.f32 %v109, %v110
      %112 = vadd.xlane.f32.xlu0 %v111
      %v113 = vpop.xlane.xlu0 %112
      %v114 = vrot.slane %v113, 4
      %v115 = vadd.f32 %v113, %v114
      %v116 = vrot.slane %v115, 2
      %v117 = vadd.f32 %v115, %v116
      %v118 = vrot.slane %v117, 1
      %v119 = vadd.f32 %v117, %v118
      %s120 = vtos %v119
      %v121 = vld [vmem:[#allocation4] sm:$0xff]
      %v122 = vld [vmem:[#allocation4 + $0x8] sm:$0xff]
      %v123 = vadd.f32 %v121, %v122
      %124 = vadd.xlane.f32.xlu0 %v123
      %v125 = vpop.xlane.xlu0 %124
      %v126 = vrot.slane %v125, 4
      %v127 = vadd.f32 %v125, %v126
      %v128 = vrot.slane %v127, 2
      %v129 = vadd.f32 %v127, %v128
      %v130 = vrot.slane %v129, 1
      %v131 = vadd.f32 %v129, %v130
      %s132 = vtos %v131
      %v133 = vld [vmem:[#allocation5] sm:$0xff]
      %v134 = vld [vmem:[#allocation5 + $0x8] sm:$0xff]
      %v135 = vadd.f32 %v133, %v134
      %136 = vadd.xlane.f32.xlu0 %v135
      %v137 = vpop.xlane.xlu0 %136
      %v138 = vrot.slane %v137, 4
      %v139 = vadd.f32 %v137, %v138
      %v140 = vrot.slane %v139, 2
      %v141 = vadd.f32 %v139, %v140
      %v142 = vrot.slane %v141, 1
      %v143 = vadd.f32 %v141, %v142
      %s144 = vtos %v143
      %v145 = vld [vmem:[#allocation6] sm:$0xff]
      %v146 = vld [vmem:[#allocation6 + $0x8] sm:$0xff]
      %v147 = vadd.f32 %v145, %v146
      %148 = vadd.xlane.f32.xlu0 %v147
      %v149 = vpop.xlane.xlu0 %148
      %v150 = vrot.slane %v149, 4
      %v151 = vadd.f32 %v149, %v150
      %v152 = vrot.slane %v151, 2
      %v153 = vadd.f32 %v151, %v152
      %v154 = vrot.slane %v153, 1
      %v155 = vadd.f32 %v153, %v154
      %s156 = vtos %v155
      %s157 = smul.f32 %s108, %s120
      %v158 = vrcp.pop 2048.0
      %s159 = vtos %v158
      %s160 = smul.f32 %s157, %s159
      %s161 = ssub.f32 %s132, %s160
      %s162 = smul.f32 %s108, %s108
      %v163 = vrcp.pop 2048.0
      %s164 = vtos %v163
      %s165 = smul.f32 %s162, %s164
      %s166 = ssub.f32 %s144, %s165
      %s167 = smul.f32 %s120, %s120
      %v168 = vrcp.pop 2048.0
      %s169 = vtos %v168
      %s170 = smul.f32 %s167, %s169
      %s171 = ssub.f32 %s156, %s170
      %v172 = vstv %s166
      %v173 = vrsqrt.pop %v172
      %v174 = vmul.f32 %v172, %v173
      %vm175 = vcmp.eq.f32.partialorder %v172, inf
      %v176 = vsel %vm175, %v172, %v174
      %vm177 = vcmp.eq.f32.partialorder %v172, 0.0
      %v178 = vand.u32 %v172, 2147483648
      %v179 = vsel %vm177, %v178, %v176
      %s180 = vtos %v179
      %v181 = vstv %s171
      %v182 = vrsqrt.pop %v181
      %v183 = vmul.f32 %v181, %v182
      %vm184 = vcmp.eq.f32.partialorder %v181, inf
      %v185 = vsel %vm184, %v181, %v183
      %vm186 = vcmp.eq.f32.partialorder %v181, 0.0
      %v187 = vand.u32 %v181, 2147483648
      %v188 = vsel %vm186, %v187, %v185
      %s189 = vtos %v188
      %s190 = smul.f32 %s180, %s189
      %v191 = vstv %s190
      %v192 = vrcp.pop %v191
      %s193 = vtos %v192
      %s194 = smul.f32 %s161, %s193
      %s195 = ssub.f32 0.0, %s194
      %s196 = scalar_lea.smem [#allocation12], 0
      %197 = sst [smem:[%s196]] %s195
    $region25: #{tpu_custom_call.1} parent=1 // pred_fallthru
      _
    // Predicated region
    $region26: #{tpu_custom_call.1} parent=1 // pred_check
      _
    $region27: #{tpu_custom_call.1} parent=1 // pred_check_branch
      %199 = sbr.rel (0) target = $region29
    $region28: #{tpu_custom_call.1} parent=1 // pred_region
      %s201 = ssub.s32 16, 16
      %202 = vsyncadd [#allocation9], %s201
      %205 = dma.smem_to_hbm [#allocation12], 16, %s2, [#allocation9]
    $region29: #{tpu_custom_call.1} parent=1 // pred_fallthru
      _
    // Predicated region
    $region30: #{tpu_custom_call.1} parent=1 // pred_check
      _
    $region31: #{tpu_custom_call.1} parent=1 // pred_check_branch
      %207 = sbr.rel (0) target = $region33
    $region32: #{tpu_custom_call.1} parent=1 // pred_region
      %208 = dma.done [#allocation9], 16
    $region33: #{tpu_custom_call.1} parent=1 // pred_fallthru
      _
    %209 = sfence
    %210 = vsyncpa [#allocation8], 1
    %211 = vsyncpa [#allocation11], 1
    %212 = vsyncpa [#allocation9], 1

</llo_original>
